<compile_context>
chip_gen: v7x
topology: tpu7x:2x2x1
jax: 0.10.0
libtpu: 0.0.40
codegen_flags: <defaults>
</compile_context>

<pallas_src>
import functools

import jax
import jax.numpy as jnp
from jax.experimental import pallas as pl
from jax.experimental.pallas import tpu as pltpu

LANES = 128


def _device_kind():
    try:
        return jax.devices()[0].device_kind.lower()
    except Exception:  # pragma: no cover - e.g. no devices during tracing tools
        return ""


def _generation_defaults():
    """Return (block_rows, n_splits) tuned per TPU generation."""
    kind = _device_kind()
    if "v7" in kind or "7x" in kind:
        # 2 TensorCores + ~3.2 TB/s HBM: big tiles (4 MiB/input/buffer, 16 MiB
        # total double-buffered f32) to amortise the ~0.35 us/step overhead,
        # and split the tile loop across both cores.
        return 8192, 2
    # v5e / v6e: single TensorCore -> no split; 4096 rows (2 MiB/input/buffer,
    # 8 MiB total) is >90% of the HBM roofline and fits v5e's 16 MiB scoped
    # VMEM default.
    return 4096, 1


def _bce_blur_kernel(pred_ref, true_ref, out_ref, acc_ref, *,
                     inv_alpha, rows, block_rows, n_tiles, tiles_per_core,
                     needs_mask, acc_rows):
    c = pl.program_id(0)            # "parallel" axis (core split on v7x)
    i = pl.program_id(1)            # "arbitrary" axis (reduction over tiles)
    t = c * tiles_per_core + i      # global tile index (no duplicates by design)

    @pl.when(i == 0)
    def _init():
        acc_ref[...] = jnp.zeros_like(acc_ref)

    x = pred_ref[...].astype(jnp.float32)
    y = true_ref[...].astype(jnp.float32)

    # Numerically stable BCEWithLogitsLoss(reduction='none'):
    #   max(x,0) - x*y + log1p(exp(-|x|))
    # exp(-|x|) is reused to build sigmoid(x) without a second exp.
    e = jnp.exp(-jnp.abs(x))                               # EUP exp
    bce = jnp.maximum(x, 0.0) - x * y + jnp.log1p(e)       # EUP log
    inv1pe = 1.0 / (1.0 + e)                               # VALU divide (keep EUP free)
    p = jnp.where(x >= 0.0, inv1pe, e * inv1pe)            # sigmoid(x)
    alpha_factor = 1.0 - jnp.exp((p - y - 1.0) * inv_alpha)  # EUP exp
    loss = bce * alpha_factor

    def _partial(v):
        if acc_rows == 8:
            # Free sublane-splitting reshape; sum over the leading axis is
            # pure VPU adds -> one (8,128) vreg partial per tile.
            return jnp.sum(v.reshape(block_rows // 8, 8, LANES), axis=0)
        return jnp.sum(v, axis=0, keepdims=True)

    if needs_mask:
        # Only the globally-last tile overhangs the array (partial block).
        @pl.when(t < n_tiles - 1)
        def _acc_full():
            acc_ref[...] += _partial(loss)

        @pl.when(t == n_tiles - 1)
        def _acc_masked():
            row = jax.lax.broadcasted_iota(jnp.int32, (block_rows, LANES), 0)
            valid = (t * block_rows + row) < rows
            acc_ref[...] += _partial(jnp.where(valid, loss, 0.0))
    else:
        acc_ref[...] += _partial(loss)

    @pl.when(i == tiles_per_core - 1)
    def _finalize():
        out_ref[...] = acc_ref[...]


def bce_blur_with_logits_loss(pred, true, alpha=0.05, block_rows=None,
                              n_splits=None):
    """Computes BCEBlurWithLogitsLoss.forward(pred, true) -> scalar mean loss."""
    assert pred.shape == true.shape
    total = int(pred.size)
    assert total > 0
    inv_alpha = 1.0 / (float(alpha) + 1e-4)

    def_rows, def_splits = _generation_defaults()
    if block_rows is None:
        block_rows = def_rows
    if n_splits is None:
        n_splits = def_splits

    pred_flat = pred.reshape(-1)
    true_flat = true.reshape(-1)

    rows = total // LANES           # full 128-wide rows handled by the kernel
    bulk = rows * LANES
    tail = total - bulk             # < 128 leftover elements

    # Sub-128 tail: a handful of plain-jnp elementwise ops + sum; this avoids
    # any whole-array jnp.pad HBM round trip in the wrapper.
    tail_sum = jnp.float32(0.0)
    if tail:
        tx = pred_flat[bulk:].astype(jnp.float32)
        ty = true_flat[bulk:].astype(jnp.float32)
        te = jnp.exp(-jnp.abs(tx))
        tbce = jnp.maximum(tx, 0.0) - tx * ty + jnp.log1p(te)
        tinv = 1.0 / (1.0 + te)
        tp = jnp.where(tx >= 0.0, tinv, te * tinv)
        tail_sum = jnp.sum(tbce * (1.0 - jnp.exp((tp - ty - 1.0) * inv_alpha)))

    if rows == 0:
        # Entire input is smaller than one lane row; nothing for the kernel.
        return tail_sum / jnp.float32(total)

    if tail:
        pred2d = pred_flat[:bulk].reshape(rows, LANES)
        true2d = true_flat[:bulk].reshape(rows, LANES)
    else:
        pred2d = pred_flat.reshape(rows, LANES)   # free reshape, no copy
        true2d = true_flat.reshape(rows, LANES)

    # Tile height: one full-extent tile for small inputs, otherwise the
    # requested tile (sublane-packing aligned) with a masked partial last block.
    if rows <= block_rows:
        block_rows = rows
        n_tiles = 1
    else:
        min_itemsize = min(jnp.dtype(pred.dtype).itemsize,
                           jnp.dtype(true.dtype).itemsize, 4)
        min_sublanes = 8 * (4 // max(min_itemsize, 1))   # f32:8, bf16:16, i8:32
        assert block_rows % min_sublanes == 0, (
            f"block_rows must be a multiple of {min_sublanes} for these dtypes")
        n_tiles = pl.cdiv(rows, block_rows)

    # Core split only when it is free: even tile count, >1 tile. An uneven
    # split would require a wasted duplicate-tile DMA, so fall back to 1 core.
    if n_splits > 1 and (n_tiles < n_splits or n_tiles % n_splits != 0):
        n_splits = 1
    tiles_per_core = n_tiles // n_splits

    needs_mask = (n_tiles * block_rows != rows)
    acc_rows = 8 if block_rows % 8 == 0 else 1

    kernel = functools.partial(
        _bce_blur_kernel,
        inv_alpha=inv_alpha,
        rows=rows,
        block_rows=block_rows,
        n_tiles=n_tiles,
        tiles_per_core=tiles_per_core,
        needs_mask=needs_mask,
        acc_rows=acc_rows,
    )

    def in_map(c, i):
        return (c * tiles_per_core + i, 0)

    partials = pl.pallas_call(
        kernel,
        out_shape=jax.ShapeDtypeStruct((n_splits * acc_rows, LANES), jnp.float32),
        grid_spec=pltpu.PrefetchScalarGridSpec(
            num_scalar_prefetch=0,
            grid=(n_splits, tiles_per_core),
            in_specs=[
                pl.BlockSpec((block_rows, LANES), in_map),
                pl.BlockSpec((block_rows, LANES), in_map),
            ],
            out_specs=pl.BlockSpec((acc_rows, LANES), lambda c, i: (c, 0)),
            scratch_shapes=[pltpu.VMEM((acc_rows, LANES), jnp.float32)],
        ),
        compiler_params=pltpu.CompilerParams(
            dimension_semantics=("parallel", "arbitrary")),
    )(pred2d, true2d)

    # Tiny cross-core / cross-sublane / cross-lane reduction + mean.
    return (jnp.sum(partials) + tail_sum) / jnp.float32(total)


def _reference(pred, true, alpha=0.05):
    x = pred.astype(jnp.float32)
    y = true.astype(jnp.float32)
    loss = jnp.maximum(x, 0.0) - x * y + jnp.log1p(jnp.exp(-jnp.abs(x)))
    dx = jax.nn.sigmoid(x) - y
    loss = loss * (1.0 - jnp.exp((dx - 1.0) / (alpha + 0.0001)))
    return jnp.mean(loss)


if __name__ == "__main__":
    key = jax.random.PRNGKey(0)
    k1, k2, k3, k4, k5, k6 = jax.random.split(key, 6)

    # NCHW inputs like the YOLOv5 loss would see (pred logits, binary targets).
    pred = jax.random.normal(k1, (2, 4, 16, 16), dtype=jnp.float32)
    true = (jax.random.uniform(k2, (2, 4, 16, 16)) > 0.5).astype(jnp.float32)
    out = jax.block_until_ready(bce_blur_with_logits_loss(pred, true, alpha=0.05))
    ref = _reference(pred, true, alpha=0.05)
    assert jnp.allclose(out, ref, atol=1e-5, rtol=1e-5)

    # Odd, non-128-divisible shape: 128-aligned bulk in the kernel + jnp tail.
    pred2 = jax.random.normal(k3, (2, 3, 7, 5), dtype=jnp.float32)
    true2 = (jax.random.uniform(k4, (2, 3, 7, 5)) > 0.5).astype(jnp.float32)
    out2 = jax.block_until_ready(bce_blur_with_logits_loss(pred2, true2, alpha=0.05))
    ref2 = _reference(pred2, true2, alpha=0.05)
    assert jnp.allclose(out2, ref2, atol=1e-5, rtol=1e-5)

    # Multi-tile accumulation path (small block_rows forces 2 grid steps).
    out3 = jax.block_until_ready(
        bce_blur_with_logits_loss(pred, true, alpha=0.05, block_rows=8))
    assert jnp.allclose(out3, ref, atol=1e-5, rtol=1e-5)

    # Masked partial last tile: rows=11 with block_rows=8 -> last tile has 3
    # valid sublane rows.
    pred4 = jax.random.normal(k5, (1, 1, 11, 128), dtype=jnp.float32)
    true4 = (jax.random.uniform(k6, (1, 1, 11, 128)) > 0.5).astype(jnp.float32)
    out4 = jax.block_until_ready(
        bce_blur_with_logits_loss(pred4, true4, alpha=0.05, block_rows=8))
    ref4 = _reference(pred4, true4, alpha=0.05)
    assert jnp.allclose(out4, ref4, atol=1e-5, rtol=1e-5)

    print("KERNEL_OK")
</pallas_src>

<mosaic_0001>
module attributes {stable_mosaic.version = 11 : i64} {
  func.func @_bce_blur_kernel(%arg0: i32, %arg1: i32, %arg2: memref<16x128xf32, #tpu.memory_space<vmem>>, %arg3: memref<16x128xf32, #tpu.memory_space<vmem>>, %arg4: memref<8x128xf32, #tpu.memory_space<vmem>>, %arg5: memref<8x128xf32, #tpu.memory_space<vmem>>) attributes {dimension_semantics = [#tpu.dimension_semantics<parallel>, #tpu.dimension_semantics<arbitrary>], iteration_bounds = array<i64: 1, 1>, scalar_prefetch = 0 : i64, scratch_operands = 1 : i64, tpu.core_type = #tpu.core_type<tc>, window_params = [{transform_indices = @transform_0, window_bounds = array<i64: 16, 128>}, {transform_indices = @transform_1, window_bounds = array<i64: 16, 128>}, {transform_indices = @transform_2, window_bounds = array<i64: 8, 128>}]} {
    %c0_i32 = arith.constant 0 : i32
    %0 = arith.cmpi eq, %arg1, %c0_i32 : i32
    %1 = arith.extui %0 : i1 to i32
    %c0_i32_0 = arith.constant 0 : i32
    %2 = arith.cmpi ne, %1, %c0_i32_0 : i32
    scf.if %2 {
      %cst_18 = arith.constant 0.000000e+00 : f32
      %40 = vector.broadcast %cst_18 : f32 to vector<8x128xf32>
      %c0_19 = arith.constant 0 : index
      %c0_20 = arith.constant 0 : index
      %41 = vector.load %arg5[%c0_19, %c0_20] : memref<8x128xf32, #tpu.memory_space<vmem>>, vector<8x128xf32>
      tpu.vector_store %arg5[%c0_19, %c0_20], %40 {strides = array<i32>} : memref<8x128xf32, #tpu.memory_space<vmem>>, vector<8x128xf32>,
    } else {
    }
    %c0 = arith.constant 0 : index
    %c0_1 = arith.constant 0 : index
    %3 = vector.load %arg2[%c0, %c0_1] : memref<16x128xf32, #tpu.memory_space<vmem>>, vector<16x128xf32>
    %c0_2 = arith.constant 0 : index
    %c0_3 = arith.constant 0 : index
    %4 = vector.load %arg3[%c0_2, %c0_3] : memref<16x128xf32, #tpu.memory_space<vmem>>, vector<16x128xf32>
    %5 = math.absf %3 : vector<16x128xf32>
    %cst = arith.constant 0.000000e+00 : f32
    %6 = vector.broadcast %cst : f32 to vector<16x128xf32>
    %7 = arith.subf %6, %5 : vector<16x128xf32>
    %8 = math.exp %7 : vector<16x128xf32>
    %cst_4 = arith.constant 0.000000e+00 : f32
    %9 = vector.broadcast %cst_4 : f32 to vector<16x128xf32>
    %10 = arith.maximumf %3, %9 : vector<16x128xf32>
    %11 = arith.mulf %3, %4 : vector<16x128xf32>
    %12 = arith.subf %10, %11 : vector<16x128xf32>
    %13 = math.log1p %8 : vector<16x128xf32>
    %14 = arith.addf %12, %13 : vector<16x128xf32>
    %cst_5 = arith.constant 1.000000e+00 : f32
    %15 = vector.broadcast %cst_5 : f32 to vector<16x128xf32>
    %16 = arith.addf %15, %8 : vector<16x128xf32>
    %cst_6 = arith.constant 1.000000e+00 : f32
    %17 = vector.broadcast %cst_6 : f32 to vector<16x128xf32>
    %18 = arith.divf %17, %16 : vector<16x128xf32>
    %cst_7 = arith.constant 0.000000e+00 : f32
    %19 = vector.broadcast %cst_7 : f32 to vector<16x128xf32>
    %20 = arith.cmpf oge, %3, %19 : vector<16x128xf32>
    %21 = arith.mulf %8, %18 : vector<16x128xf32>
    %22 = arith.select %20, %18, %21 : vector<16x128xi1>, vector<16x128xf32>
    %23 = arith.subf %22, %4 : vector<16x128xf32>
    %cst_8 = arith.constant 1.000000e+00 : f32
    %24 = vector.broadcast %cst_8 : f32 to vector<16x128xf32>
    %25 = arith.subf %23, %24 : vector<16x128xf32>
    %cst_9 = arith.constant 19.9600792 : f32
    %26 = vector.broadcast %cst_9 : f32 to vector<16x128xf32>
    %27 = arith.mulf %25, %26 : vector<16x128xf32>
    %28 = math.exp %27 : vector<16x128xf32>
    %cst_10 = arith.constant 1.000000e+00 : f32
    %29 = vector.broadcast %cst_10 : f32 to vector<16x128xf32>
    %30 = arith.subf %29, %28 : vector<16x128xf32>
    %31 = arith.mulf %14, %30 : vector<16x128xf32>
    %c0_11 = arith.constant 0 : index
    %c0_12 = arith.constant 0 : index
    %32 = vector.load %arg5[%c0_11, %c0_12] : memref<8x128xf32, #tpu.memory_space<vmem>>, vector<8x128xf32>
    %33 = vector.shape_cast %31 : vector<16x128xf32> to vector<2x8x128xf32>
    %cst_13 = arith.constant dense<0.000000e+00> : vector<8x128xf32>
    %34 = vector.multi_reduction <add>, %33, %cst_13 [0] : vector<2x8x128xf32> to vector<8x128xf32>
    %35 = arith.addf %32, %34 : vector<8x128xf32>
    %c0_14 = arith.constant 0 : index
    %c0_15 = arith.constant 0 : index
    %36 = vector.load %arg5[%c0_14, %c0_15] : memref<8x128xf32, #tpu.memory_space<vmem>>, vector<8x128xf32>
    tpu.vector_store %arg5[%c0_14, %c0_15], %35 {strides = array<i32>} : memref<8x128xf32, #tpu.memory_space<vmem>>, vector<8x128xf32>,
    %c0_i32_16 = arith.constant 0 : i32
    %37 = arith.cmpi eq, %arg1, %c0_i32_16 : i32
    %38 = arith.extui %37 : i1 to i32
    %c0_i32_17 = arith.constant 0 : i32
    %39 = arith.cmpi ne, %38, %c0_i32_17 : i32
    scf.if %39 {
      %c0_18 = arith.constant 0 : index
      %c0_19 = arith.constant 0 : index
      %40 = vector.load %arg5[%c0_18, %c0_19] : memref<8x128xf32, #tpu.memory_space<vmem>>, vector<8x128xf32>
      %c0_20 = arith.constant 0 : index
      %c0_21 = arith.constant 0 : index
      %41 = vector.load %arg4[%c0_20, %c0_21] : memref<8x128xf32, #tpu.memory_space<vmem>>, vector<8x128xf32>
      tpu.vector_store %arg4[%c0_20, %c0_21], %40 {strides = array<i32>} : memref<8x128xf32, #tpu.memory_space<vmem>>, vector<8x128xf32>,
    } else {
    }
    return
  }
  func.func @transform_0(%arg0: i32, %arg1: i32) -> (i32, i32) {
    %c1_i32 = arith.constant 1 : i32
    %0 = arith.muli %arg0, %c1_i32 : i32
    %1 = arith.addi %0, %arg1 : i32
    %c0_i32 = arith.constant 0 : i32
    %c0_i32_0 = arith.constant 0 : i32
    return %1, %c0_i32 : i32, i32
  }
  func.func @transform_1(%arg0: i32, %arg1: i32) -> (i32, i32) {
    %c1_i32 = arith.constant 1 : i32
    %0 = arith.muli %arg0, %c1_i32 : i32
    %1 = arith.addi %0, %arg1 : i32
    %c0_i32 = arith.constant 0 : i32
    %c0_i32_0 = arith.constant 0 : i32
    return %1, %c0_i32 : i32, i32
  }
  func.func @transform_2(%arg0: i32, %arg1: i32) -> (i32, i32) {
    %c0_i32 = arith.constant 0 : i32
    %c0_i32_0 = arith.constant 0 : i32
    return %arg0, %c0_i32 : i32, i32
  }
}

</mosaic_0001>

<llo_original>
// kernel: tpu_custom_call.1
$region0: #{tpu_custom_call.1}
  #allocation0 [shape = 'u32[]', space=smem, size = 0x4, offset = 0x4, fixed_abs, tag = 'smem constant byte address 0x4 - core index']
  #allocation1 [shape = 'u32[144,128]{1,0:T(1,128)}', space=vmem, size = 0x12000, scoped, tag = 'internal scratch']
  #allocation2 [shape = 'f32[8,128]{1,0:T(8,128)}', space=vmem, size = 0x1000, scoped, tag = 'scratch operand']
  %s0 = inlined_call_operand.hbm [shape: f32[16,128], index: 0, kind: input, shape index: {}]
  %s1 = inlined_call_operand.hbm [shape: f32[16,128], index: 1, kind: input, shape index: {}]
  %s2 = inlined_call_operand.hbm [shape: f32[8,128], index: 2, kind: output, shape index: {}]
  %s3 = sld [smem:[#allocation0]]
  $region34: #{tpu_custom_call.1} parent=0
    _
  %s5 = ssub.s32 1, %s3
  %s6 = scalar_select 0, %s5, %s3
  $region1: #{tpu_custom_call.1} parent=0
    #allocation3 [shape = 'u8[8192]{0}', space=vmem, size = 0x2000, scoped, tag = 'input window, operand 0, single buffered']
    #allocation4 [shape = 's32[1]{0}', space=sflag, size = 0x4, scoped, tag = 'scoped memory for tpu_custom_call.1']
    #allocation5 [shape = 's32[1]{0}', space=sflag, size = 0x4, scoped, tag = 'scoped memory for tpu_custom_call.1']
    #allocation6 [shape = 'u8[8192]{0}', space=vmem, size = 0x2000, scoped, tag = 'input window, operand 1, single buffered']
    #allocation7 [shape = 's32[1]{0}', space=sflag, size = 0x4, scoped, tag = 'scoped memory for tpu_custom_call.1']
    #allocation8 [shape = 'u8[4096]{0}', space=vmem, size = 0x1000, scoped, tag = 'output window, operand 0, single buffered']
    %7 = vsyncpa [#allocation4], 0
    %8 = vsyncpa [#allocation7], 0
    %9 = vsyncpa [#allocation5], 0
    // Predicated region
    $region2: #{tpu_custom_call.1} parent=1 // pred_check
      _
    $region3: #{tpu_custom_call.1} parent=1 // pred_check_branch
      %11 = sbr.rel (0) target = $region5
    $region4: #{tpu_custom_call.1} parent=1 // pred_region
      %s12 = sadd.s32 0, 0
      %s13 = smul.u32 2, %s12
      %s15 = ssub.s32 256, 256
      %16 = vsyncadd [#allocation4], %s15
      %s17 = smul.addr %s13, 128
      %s18 = scalar_lea.hbm %s0, %s17
      %s19 = sshll.u32 [#allocation3], 4
      %s20 = int_to_ptr.vmem [resolvable:$true] %s19
      %25 = dma.hbm_to_vmem [thread:$0]  %s18, 256, %s20, [#allocation4], 128, 128, 8
    $region5: #{tpu_custom_call.1} parent=1 // pred_fallthru
      _
    // Predicated region
    $region6: #{tpu_custom_call.1} parent=1 // pred_check
      _
    $region7: #{tpu_custom_call.1} parent=1 // pred_check_branch
      %27 = sbr.rel (0) target = $region9
    $region8: #{tpu_custom_call.1} parent=1 // pred_region
      %s28 = sadd.s32 0, 0
      %s29 = smul.u32 2, %s28
      %s31 = ssub.s32 256, 256
      %32 = vsyncadd [#allocation7], %s31
      %s33 = smul.addr %s29, 128
      %s34 = scalar_lea.hbm %s1, %s33
      %s35 = sshll.u32 [#allocation6], 4
      %s36 = int_to_ptr.vmem [resolvable:$true] %s35
      %41 = dma.hbm_to_vmem [thread:$0]  %s34, 256, %s36, [#allocation7], 128, 128, 8
    $region9: #{tpu_custom_call.1} parent=1 // pred_fallthru
      _
    // Predicated region
    $region10: #{tpu_custom_call.1} parent=1 // pred_check
      _
    $region11: #{tpu_custom_call.1} parent=1 // pred_check_branch
      %43 = sbr.rel (0) target = $region13
    $region12: #{tpu_custom_call.1} parent=1 // pred_region
      %44 = dma.done [#allocation4], 256
    $region13: #{tpu_custom_call.1} parent=1 // pred_fallthru
      _
    // Predicated region
    $region14: #{tpu_custom_call.1} parent=1 // pred_check
      _
    $region15: #{tpu_custom_call.1} parent=1 // pred_check_branch
      %46 = sbr.rel (0) target = $region17
    $region16: #{tpu_custom_call.1} parent=1 // pred_region
      %47 = dma.done [#allocation7], 256
    $region17: #{tpu_custom_call.1} parent=1 // pred_fallthru
      _
    %s48 = sadd.s32 0, 0
    %s49 = smul.u32 2, %s48
    %s50 = sadd.s32 0, 0
    %s51 = smul.u32 2, %s50
    %p52 = scmp.eq.s32.totalorder 0, 0
    // Predicated region
    $region18: #{tpu_custom_call.1} parent=1 // pred_check
      %p53 = pneg %p52
    $region19: #{tpu_custom_call.1} parent=1 // pred_check_branch
      %55 = sbr.rel (%p53) target = $region21
    $region20: #{tpu_custom_call.1} parent=1 // pred_region
      %56 = vst [vmem:[#allocation2] sm:$0xff] 0.0
    $region21: #{tpu_custom_call.1} parent=1 // pred_fallthru
      _
    %v57 = vld [vmem:[#allocation3] sm:$0xff]
    %v58 = vld [vmem:[#allocation3 + $0x8] sm:$0xff]
    %v59 = vld [vmem:[#allocation6] sm:$0xff]
    %v60 = vld [vmem:[#allocation6 + $0x8] sm:$0xff]
    %v61 = vand.u32 2147483647, %v57
    %v62 = vand.u32 2147483647, %v58
    %v63 = vsub.f32 0.0, %v61
    %v64 = vsub.f32 0.0, %v62
    %v65 = vmul.f32 %v63, 1.442695
    %v66 = vpow.pop %v65
    %v67 = vmul.f32 %v64, 1.442695
    %v68 = vpow.pop %v67
    %v69 = vmax.f32 %v57, 0.0
    %v70 = vmax.f32 %v58, 0.0
    %v71 = vmul.f32 %v57, %v59
    %v72 = vmul.f32 %v58, %v60
    %v73 = vsub.f32 %v69, %v71
    %v74 = vsub.f32 %v70, %v72
    %v75 = vadd.f32 %v66, 1.0
    %v76 = vlog2.pop %v75
    %v77 = vmul.f32 %v76, 0.6931472
    %v78 = vmul.f32 -0.5, %v66
    %v79 = vadd.f32 %v78, 1.0
    %v80 = vmul.f32 %v79, %v66
    %v81 = vand.u32 2147483647, %v66
    %vm82 = vcmp.lt.f32.partialorder %v81, 0.0004427343
    %v83 = vsel %vm82, %v80, %v77
    %v84 = vadd.f32 %v68, 1.0
    %v85 = vlog2.pop %v84
    %v86 = vmul.f32 %v85, 0.6931472
    %v87 = vmul.f32 -0.5, %v68
    %v88 = vadd.f32 %v87, 1.0
    %v89 = vmul.f32 %v88, %v68
    %v90 = vand.u32 2147483647, %v68
    %vm91 = vcmp.lt.f32.partialorder %v90, 0.0004427343
    %v92 = vsel %vm91, %v89, %v86
    %v93 = vadd.f32 %v73, %v83
    %v94 = vadd.f32 %v74, %v92
    %v95 = vadd.f32 %v66, 1.0
    %v96 = vadd.f32 %v68, 1.0
    %v97 = vrcp.pop %v95
    %v98 = vmul.f32 1.0, %v97
    %v99 = vrcp.pop %v96
    %v100 = vmul.f32 1.0, %v99
    %vm101 = vcmp.ge.f32.partialorder %v57, 0.0
    %vm102 = vcmp.ge.f32.partialorder %v58, 0.0
    %v103 = vmul.f32 %v66, %v98
    %v104 = vmul.f32 %v68, %v100
    %v105 = vsel %vm101, %v98, %v103
    %v106 = vsel %vm102, %v100, %v104
    %v107 = vsub.f32 %v105, %v59
    %v108 = vsub.f32 %v106, %v60
    %v109 = vsub.f32 %v107, 1.0
    %v110 = vsub.f32 %v108, 1.0
    %v111 = vmul.f32 %v109, 19.96008
    %v112 = vmul.f32 %v110, 19.96008
    %v113 = vmul.f32 %v111, 1.442695
    %v114 = vpow.pop %v113
    %v115 = vmul.f32 %v112, 1.442695
    %v116 = vpow.pop %v115
    %v117 = vsub.f32 1.0, %v114
    %v118 = vsub.f32 1.0, %v116
    %v119 = vmul.f32 %v93, %v117
    %v120 = vmul.f32 %v94, %v118
    %v121 = vld [vmem:[#allocation2] sm:$0xff]
    %v122 = vadd.f32 %v119, %v120
    %v123 = vadd.f32 %v121, %v122
    %124 = vst [vmem:[#allocation2] sm:$0xff] %v123
    // Predicated region
    $region22: #{tpu_custom_call.1} parent=1 // pred_check
      %p125 = pneg %p52
    $region23: #{tpu_custom_call.1} parent=1 // pred_check_branch
      %127 = sbr.rel (%p125) target = $region25
    $region24: #{tpu_custom_call.1} parent=1 // pred_region
      %v128 = vld [vmem:[#allocation2] sm:$0xff]
      %129 = vst [vmem:[#allocation8] sm:$0xff] %v128
    $region25: #{tpu_custom_call.1} parent=1 // pred_fallthru
      _
    // Predicated region
    $region26: #{tpu_custom_call.1} parent=1 // pred_check
      _
    $region27: #{tpu_custom_call.1} parent=1 // pred_check_branch
      %131 = sbr.rel (0) target = $region29
    $region28: #{tpu_custom_call.1} parent=1 // pred_region
      %s133 = ssub.s32 128, 128
      %134 = vsyncadd [#allocation5], %s133
      %s136 = sshll.u32 [#allocation8], 4
      %s137 = int_to_ptr.vmem [resolvable:$true] %s136
      %139 = dma.vmem_to_hbm [thread:$0]  %s137, 128, %s2, [#allocation5]
    $region29: #{tpu_custom_call.1} parent=1 // pred_fallthru
      _
    // Predicated region
    $region30: #{tpu_custom_call.1} parent=1 // pred_check
      _
    $region31: #{tpu_custom_call.1} parent=1 // pred_check_branch
      %141 = sbr.rel (0) target = $region33
    $region32: #{tpu_custom_call.1} parent=1 // pred_region
      %142 = dma.done [#allocation5], 128
    $region33: #{tpu_custom_call.1} parent=1 // pred_fallthru
      _
    %143 = vsyncpa [#allocation4], 1
    %144 = vsyncpa [#allocation7], 1
    %145 = vsyncpa [#allocation5], 1

</llo_original>
